<compile_context>
chip_gen: v7x
topology: tpu7x:2x2x1
jax: 0.10.0
libtpu: 0.0.40
codegen_flags: <defaults>
</compile_context>

<pallas_src>
import functools

import jax
import jax.numpy as jnp
from jax.experimental import pallas as pl
from jax.experimental.pallas import tpu as pltpu

LANE = 128     # TPU lane width (last dim)
SUBLANE = 8    # TPU sublane width (second-to-last dim)


def _round_up(n, m):
    return ((n + m - 1) // m) * m


# ---------------------------------------------------------------------------
# Kernel: one batch tile, all four layers fused, weights VMEM-resident.
# bf16 operands into the MXU, f32 accumulate; bias/ReLU/store in f32.
# ---------------------------------------------------------------------------
def dqn_kernel(x_ref, w1_ref, b1_ref, w2_ref, b2_ref, w3_ref, b3_ref,
               w4_ref, b4_ref, o_ref):
    h = jnp.dot(x_ref[...].astype(jnp.bfloat16), w1_ref[...],
                preferred_element_type=jnp.float32)
    h = jnp.maximum(h + b1_ref[...], 0.0)

    h = jnp.dot(h.astype(jnp.bfloat16), w2_ref[...],
                preferred_element_type=jnp.float32)
    h = jnp.maximum(h + b2_ref[...], 0.0)

    h = jnp.dot(h.astype(jnp.bfloat16), w3_ref[...],
                preferred_element_type=jnp.float32)
    h = jnp.maximum(h + b3_ref[...], 0.0)

    h = jnp.dot(h.astype(jnp.bfloat16), w4_ref[...],
                preferred_element_type=jnp.float32)
    o_ref[...] = (h + b4_ref[...]).astype(o_ref.dtype)


# ---------------------------------------------------------------------------
# Parameter handling
# ---------------------------------------------------------------------------
def init_dqn_params(key, features_n, outputs_n, l1, l2, l3):
    """PyTorch nn.Linear-style init (uniform +-1/sqrt(fan_in)).
    Weights stored as [in, out]; biases as [1, out]; f32 master copy."""
    dims = [(features_n, l1), (l1, l2), (l2, l3), (l3, outputs_n)]
    params = {}
    for i, (fin, fout) in enumerate(dims, start=1):
        key, kw, kb = jax.random.split(key, 3)
        bound = 1.0 / jnp.sqrt(float(fin))
        params[f"w{i}"] = jax.random.uniform(
            kw, (fin, fout), jnp.float32, minval=-bound, maxval=bound)
        params[f"b{i}"] = jax.random.uniform(
            kb, (1, fout), jnp.float32, minval=-bound, maxval=bound)
    return params


def pad_params_for_tpu(params, *, weight_dtype=jnp.bfloat16):
    """Zero-pad every layer's output width (and thus subsequent input widths)
    to a multiple of 128 lanes; weights cast to `weight_dtype` (bf16 for the
    native MXU path on v6e/v7x), biases kept in f32 for the f32 bias-add."""
    padded = {}
    for i in range(1, 5):
        w = params[f"w{i}"]
        b = params[f"b{i}"]
        fin, fout = w.shape
        fin_p = fin if i == 1 else _round_up(fin, LANE)
        fout_p = _round_up(fout, LANE)
        padded[f"w{i}"] = jnp.pad(
            w, ((0, fin_p - fin), (0, fout_p - fout))).astype(weight_dtype)
        padded[f"b{i}"] = jnp.pad(
            b, ((0, 0), (0, fout_p - fout))).astype(jnp.float32)
    return padded


# ---------------------------------------------------------------------------
# Forward wrapper
# ---------------------------------------------------------------------------
def _resident_spec(shape):
    """Full-array BlockSpec whose block index is constant across the grid so
    the operand stays resident in VMEM (no per-step re-DMA).  Fresh closure
    per call -> no late-binding hazard."""
    zeros = (0,) * len(shape)
    return pl.BlockSpec(shape, lambda i: zeros)


def dqn_forward(x, padded_params, *, outputs_n, block_b=1024,
                out_dtype=jnp.float32):
    """x: [B, features_n] f32.  padded_params: output of pad_params_for_tpu.
    Returns [B, outputs_n] in out_dtype (f32 default, matching the module)."""
    B, F = x.shape
    p = padded_params
    out_p = p["w4"].shape[1]          # padded (lane-dense) output width

    # Batch tile: always a multiple of the 8-row sublane (robust against any
    # caller-provided block_b), at most block_b rows, and split into >= 2
    # grid steps whenever possible so v7x's second TensorCore gets work.
    block_b = max(SUBLANE, _round_up(block_b, SUBLANE))
    b_sub = _round_up(B, SUBLANE)
    half = _round_up((b_sub + 1) // 2, SUBLANE)
    tb = max(SUBLANE, min(block_b, half))
    b_pad = _round_up(B, tb)
    if b_pad != B:
        x = jnp.pad(x, ((0, b_pad - B), (0, 0)))
    grid = (b_pad // tb,)

    weight_args = (p["w1"], p["b1"], p["w2"], p["b2"],
                   p["w3"], p["b3"], p["w4"], p["b4"])

    in_specs = [pl.BlockSpec((tb, F), lambda i: (i, 0))]        # batch-tiled x
    in_specs += [_resident_spec(a.shape) for a in weight_args]  # VMEM-resident

    # Advisory cost hint for the XLA scheduler (padded shapes).
    d1, d2, d3 = p["w1"].shape[1], p["w2"].shape[1], p["w3"].shape[1]
    flops = 2 * b_pad * (F * d1 + d1 * d2 + d2 * d3 + d3 * out_p)
    bytes_accessed = (4 * b_pad * F
                      + jnp.dtype(out_dtype).itemsize * b_pad * out_p
                      + sum(int(a.size) * a.dtype.itemsize
                            for a in weight_args))

    out = pl.pallas_call(
        dqn_kernel,
        out_shape=jax.ShapeDtypeStruct((b_pad, out_p), out_dtype),
        grid=grid,
        in_specs=in_specs,
        out_specs=pl.BlockSpec((tb, out_p), lambda i: (i, 0)),
        compiler_params=pltpu.CompilerParams(
            dimension_semantics=("parallel",)),
        cost_estimate=pl.CostEstimate(
            flops=flops, transcendentals=0, bytes_accessed=bytes_accessed),
    )(x, *weight_args)

    # Slice back to the logical shape.  Downstream code that can consume the
    # padded (B, 128) Q-values directly (e.g. fused argmax) should skip this.
    return out[:B, :outputs_n]


# ---------------------------------------------------------------------------
# References
# ---------------------------------------------------------------------------
def dqn_reference_f32(x, params):
    """Pure-f32 reference == the original PyTorch module."""
    h = jnp.maximum(x @ params["w1"] + params["b1"], 0.0)
    h = jnp.maximum(h @ params["w2"] + params["b2"], 0.0)
    h = jnp.maximum(h @ params["w3"] + params["b3"], 0.0)
    return h @ params["w4"] + params["b4"]


def dqn_reference_bf16(x, params):
    """Reference matching the kernel's numerics exactly: bf16 matmul operands,
    f32 accumulation, f32 bias-add / ReLU."""
    def lin(h, w, b):
        return jnp.dot(h.astype(jnp.bfloat16), w.astype(jnp.bfloat16),
                       preferred_element_type=jnp.float32) + b
    h = jnp.maximum(lin(x, params["w1"], params["b1"]), 0.0)
    h = jnp.maximum(lin(h, params["w2"], params["b2"]), 0.0)
    h = jnp.maximum(lin(h, params["w3"], params["b3"]), 0.0)
    return lin(h, params["w4"], params["b4"])


if __name__ == "__main__":
    # Shapes consistent with DQN(features_n, outputs_n, l1, l2, l3).
    features_n, outputs_n = 16, 4
    l1, l2, l3 = 32, 32, 16

    key = jax.random.PRNGKey(0)
    key, kp = jax.random.split(key)
    params = init_dqn_params(kp, features_n, outputs_n, l1, l2, l3)
    padded_params = pad_params_for_tpu(params)

    fwd = jax.jit(functools.partial(dqn_forward, outputs_n=outputs_n))

    # --- Small batch (single grid step) ------------------------------------
    key, kx = jax.random.split(key)
    x_small = jax.random.normal(kx, (8, features_n), jnp.float32)
    out_small = jax.block_until_ready(fwd(x_small, padded_params))
    assert out_small.shape == (8, outputs_n)
    assert jnp.allclose(out_small, dqn_reference_bf16(x_small, params),
                        atol=1e-3, rtol=1e-3), \
        "mismatch vs bf16-matched reference (small batch)"
    assert jnp.allclose(out_small, dqn_reference_f32(x_small, params),
                        atol=5e-2, rtol=5e-2), \
        "mismatch vs f32 reference (small batch)"

    # --- Larger, non-tile-aligned batch (multi-step grid + batch padding) ---
    key, kx = jax.random.split(key)
    x_big = jax.random.normal(kx, (272, features_n), jnp.float32)
    out_big = jax.block_until_ready(fwd(x_big, padded_params))
    assert out_big.shape == (272, outputs_n)
    assert jnp.allclose(out_big, dqn_reference_bf16(x_big, params),
                        atol=1e-3, rtol=1e-3), \
        "mismatch vs bf16-matched reference (large batch)"
    assert jnp.allclose(out_big, dqn_reference_f32(x_big, params),
                        atol=5e-2, rtol=5e-2), \
        "mismatch vs f32 reference (large batch)"

    print("KERNEL_OK")
</pallas_src>

<mosaic_0001>
module attributes {stable_mosaic.version = 11 : i64} {
  func.func @dqn_kernel(%arg0: i32, %arg1: memref<8x16xf32, #tpu.memory_space<vmem>>, %arg2: memref<16x128xbf16, #tpu.memory_space<vmem>>, %arg3: memref<1x128xf32, #tpu.memory_space<vmem>>, %arg4: memref<128x128xbf16, #tpu.memory_space<vmem>>, %arg5: memref<1x128xf32, #tpu.memory_space<vmem>>, %arg6: memref<128x128xbf16, #tpu.memory_space<vmem>>, %arg7: memref<1x128xf32, #tpu.memory_space<vmem>>, %arg8: memref<128x128xbf16, #tpu.memory_space<vmem>>, %arg9: memref<1x128xf32, #tpu.memory_space<vmem>>, %arg10: memref<8x128xf32, #tpu.memory_space<vmem>>) attributes {dimension_semantics = [#tpu.dimension_semantics<parallel>], iteration_bounds = array<i64: 1>, scalar_prefetch = 0 : i64, scratch_operands = 0 : i64, tpu.core_type = #tpu.core_type<tc>, window_params = [{transform_indices = @transform_0, window_bounds = array<i64: 8, 16>}, {pipeline_mode = #tpu.pipeline_mode<synchronous>, transform_indices = @transform_1, window_bounds = array<i64: 16, 128>}, {pipeline_mode = #tpu.pipeline_mode<synchronous>, transform_indices = @transform_2, window_bounds = array<i64: 1, 128>}, {pipeline_mode = #tpu.pipeline_mode<synchronous>, transform_indices = @transform_3, window_bounds = array<i64: 128, 128>}, {pipeline_mode = #tpu.pipeline_mode<synchronous>, transform_indices = @transform_4, window_bounds = array<i64: 1, 128>}, {pipeline_mode = #tpu.pipeline_mode<synchronous>, transform_indices = @transform_5, window_bounds = array<i64: 128, 128>}, {pipeline_mode = #tpu.pipeline_mode<synchronous>, transform_indices = @transform_6, window_bounds = array<i64: 1, 128>}, {pipeline_mode = #tpu.pipeline_mode<synchronous>, transform_indices = @transform_7, window_bounds = array<i64: 128, 128>}, {pipeline_mode = #tpu.pipeline_mode<synchronous>, transform_indices = @transform_8, window_bounds = array<i64: 1, 128>}, {transform_indices = @transform_9, window_bounds = array<i64: 8, 128>}]} {
    %c0 = arith.constant 0 : index
    %c0_0 = arith.constant 0 : index
    %0 = vector.load %arg1[%c0, %c0_0] : memref<8x16xf32, #tpu.memory_space<vmem>>, vector<8x16xf32>
    %1 = arith.truncf %0 : vector<8x16xf32> to vector<8x16xbf16>
    %c0_1 = arith.constant 0 : index
    %c0_2 = arith.constant 0 : index
    %2 = vector.load %arg2[%c0_1, %c0_2] : memref<16x128xbf16, #tpu.memory_space<vmem>>, vector<16x128xbf16>
    %cst = arith.constant dense<0.000000e+00> : vector<8x128xf32>
    %3 = tpu.matmul %1, %2, %cst {dimension_numbers = #tpu.dot_dimension_numbers<[1], [0], [0], [1], [0, 0, 1, 1], [], []>} : vector<8x16xbf16>, vector<16x128xbf16>, vector<8x128xf32> -> vector<8x128xf32>
    %c0_3 = arith.constant 0 : index
    %c0_4 = arith.constant 0 : index
    %4 = vector.load %arg3[%c0_3, %c0_4] : memref<1x128xf32, #tpu.memory_space<vmem>>, vector<1x128xf32>
    %5 = vector.broadcast %4 : vector<1x128xf32> to vector<8x128xf32>
    %6 = arith.addf %3, %5 : vector<8x128xf32>
    %cst_5 = arith.constant 0.000000e+00 : f32
    %7 = vector.broadcast %cst_5 : f32 to vector<8x128xf32>
    %8 = arith.maximumf %6, %7 : vector<8x128xf32>
    %9 = arith.truncf %8 : vector<8x128xf32> to vector<8x128xbf16>
    %c0_6 = arith.constant 0 : index
    %c0_7 = arith.constant 0 : index
    %10 = vector.load %arg4[%c0_6, %c0_7] : memref<128x128xbf16, #tpu.memory_space<vmem>>, vector<128x128xbf16>
    %cst_8 = arith.constant dense<0.000000e+00> : vector<8x128xf32>
    %11 = tpu.matmul %9, %10, %cst_8 {dimension_numbers = #tpu.dot_dimension_numbers<[1], [0], [0], [1], [0, 0, 1, 1], [], []>} : vector<8x128xbf16>, vector<128x128xbf16>, vector<8x128xf32> -> vector<8x128xf32>
    %c0_9 = arith.constant 0 : index
    %c0_10 = arith.constant 0 : index
    %12 = vector.load %arg5[%c0_9, %c0_10] : memref<1x128xf32, #tpu.memory_space<vmem>>, vector<1x128xf32>
    %13 = vector.broadcast %12 : vector<1x128xf32> to vector<8x128xf32>
    %14 = arith.addf %11, %13 : vector<8x128xf32>
    %cst_11 = arith.constant 0.000000e+00 : f32
    %15 = vector.broadcast %cst_11 : f32 to vector<8x128xf32>
    %16 = arith.maximumf %14, %15 : vector<8x128xf32>
    %17 = arith.truncf %16 : vector<8x128xf32> to vector<8x128xbf16>
    %c0_12 = arith.constant 0 : index
    %c0_13 = arith.constant 0 : index
    %18 = vector.load %arg6[%c0_12, %c0_13] : memref<128x128xbf16, #tpu.memory_space<vmem>>, vector<128x128xbf16>
    %cst_14 = arith.constant dense<0.000000e+00> : vector<8x128xf32>
    %19 = tpu.matmul %17, %18, %cst_14 {dimension_numbers = #tpu.dot_dimension_numbers<[1], [0], [0], [1], [0, 0, 1, 1], [], []>} : vector<8x128xbf16>, vector<128x128xbf16>, vector<8x128xf32> -> vector<8x128xf32>
    %c0_15 = arith.constant 0 : index
    %c0_16 = arith.constant 0 : index
    %20 = vector.load %arg7[%c0_15, %c0_16] : memref<1x128xf32, #tpu.memory_space<vmem>>, vector<1x128xf32>
    %21 = vector.broadcast %20 : vector<1x128xf32> to vector<8x128xf32>
    %22 = arith.addf %19, %21 : vector<8x128xf32>
    %cst_17 = arith.constant 0.000000e+00 : f32
    %23 = vector.broadcast %cst_17 : f32 to vector<8x128xf32>
    %24 = arith.maximumf %22, %23 : vector<8x128xf32>
    %25 = arith.truncf %24 : vector<8x128xf32> to vector<8x128xbf16>
    %c0_18 = arith.constant 0 : index
    %c0_19 = arith.constant 0 : index
    %26 = vector.load %arg8[%c0_18, %c0_19] : memref<128x128xbf16, #tpu.memory_space<vmem>>, vector<128x128xbf16>
    %cst_20 = arith.constant dense<0.000000e+00> : vector<8x128xf32>
    %27 = tpu.matmul %25, %26, %cst_20 {dimension_numbers = #tpu.dot_dimension_numbers<[1], [0], [0], [1], [0, 0, 1, 1], [], []>} : vector<8x128xbf16>, vector<128x128xbf16>, vector<8x128xf32> -> vector<8x128xf32>
    %c0_21 = arith.constant 0 : index
    %c0_22 = arith.constant 0 : index
    %28 = vector.load %arg9[%c0_21, %c0_22] : memref<1x128xf32, #tpu.memory_space<vmem>>, vector<1x128xf32>
    %29 = vector.broadcast %28 : vector<1x128xf32> to vector<8x128xf32>
    %30 = arith.addf %27, %29 : vector<8x128xf32>
    %c0_23 = arith.constant 0 : index
    %c0_24 = arith.constant 0 : index
    %31 = vector.load %arg10[%c0_23, %c0_24] : memref<8x128xf32, #tpu.memory_space<vmem>>, vector<8x128xf32>
    tpu.vector_store %arg10[%c0_23, %c0_24], %30 {strides = array<i32>} : memref<8x128xf32, #tpu.memory_space<vmem>>, vector<8x128xf32>,
    return
  }
  func.func @transform_0(%arg0: i32) -> (i32, i32) {
    %c0_i32 = arith.constant 0 : i32
    %c0_i32_0 = arith.constant 0 : i32
    return %arg0, %c0_i32 : i32, i32
  }
  func.func @transform_1(%arg0: i32) -> (i32, i32) {
    %c0_i32 = arith.constant 0 : i32
    %c0_i32_0 = arith.constant 0 : i32
    %c0_i32_1 = arith.constant 0 : i32
    return %c0_i32, %c0_i32_0 : i32, i32
  }
  func.func @transform_2(%arg0: i32) -> (i32, i32) {
    %c0_i32 = arith.constant 0 : i32
    %c0_i32_0 = arith.constant 0 : i32
    %c0_i32_1 = arith.constant 0 : i32
    return %c0_i32, %c0_i32_0 : i32, i32
  }
  func.func @transform_3(%arg0: i32) -> (i32, i32) {
    %c0_i32 = arith.constant 0 : i32
    %c0_i32_0 = arith.constant 0 : i32
    %c0_i32_1 = arith.constant 0 : i32
    return %c0_i32, %c0_i32_0 : i32, i32
  }
  func.func @transform_4(%arg0: i32) -> (i32, i32) {
    %c0_i32 = arith.constant 0 : i32
    %c0_i32_0 = arith.constant 0 : i32
    %c0_i32_1 = arith.constant 0 : i32
    return %c0_i32, %c0_i32_0 : i32, i32
  }
  func.func @transform_5(%arg0: i32) -> (i32, i32) {
    %c0_i32 = arith.constant 0 : i32
    %c0_i32_0 = arith.constant 0 : i32
    %c0_i32_1 = arith.constant 0 : i32
    return %c0_i32, %c0_i32_0 : i32, i32
  }
  func.func @transform_6(%arg0: i32) -> (i32, i32) {
    %c0_i32 = arith.constant 0 : i32
    %c0_i32_0 = arith.constant 0 : i32
    %c0_i32_1 = arith.constant 0 : i32
    return %c0_i32, %c0_i32_0 : i32, i32
  }
  func.func @transform_7(%arg0: i32) -> (i32, i32) {
    %c0_i32 = arith.constant 0 : i32
    %c0_i32_0 = arith.constant 0 : i32
    %c0_i32_1 = arith.constant 0 : i32
    return %c0_i32, %c0_i32_0 : i32, i32
  }
  func.func @transform_8(%arg0: i32) -> (i32, i32) {
    %c0_i32 = arith.constant 0 : i32
    %c0_i32_0 = arith.constant 0 : i32
    %c0_i32_1 = arith.constant 0 : i32
    return %c0_i32, %c0_i32_0 : i32, i32
  }
  func.func @transform_9(%arg0: i32) -> (i32, i32) {
    %c0_i32 = arith.constant 0 : i32
    %c0_i32_0 = arith.constant 0 : i32
    return %arg0, %c0_i32 : i32, i32
  }
}

</mosaic_0001>

<llo_original>
// kernel: dqn_forward.1
$region0: #{dqn_forward.1}
  #allocation0 [shape = 'u32[]', space=smem, size = 0x4, offset = 0x4, fixed_abs, tag = 'smem constant byte address 0x4 - core index']
  #allocation1 [shape = 'u32[144,128]{1,0:T(1,128)}', space=vmem, size = 0x12000, scoped, tag = 'internal scratch']
  %s0 = inlined_call_operand.hbm [shape: f32[8,16], index: 0, kind: input, shape index: {}]
  %s1 = inlined_call_operand.vmem [shape: bf16[16,128], index: 1, kind: input, shape index: {}]
  %s2 = inlined_call_operand.vmem [shape: f32[1,128], index: 2, kind: input, shape index: {}]
  %s3 = inlined_call_operand.hbm [shape: bf16[128,128], index: 3, kind: input, shape index: {}]
  %s4 = inlined_call_operand.vmem [shape: f32[1,128], index: 4, kind: input, shape index: {}]
  %s5 = inlined_call_operand.hbm [shape: bf16[128,128], index: 5, kind: input, shape index: {}]
  %s6 = inlined_call_operand.vmem [shape: f32[1,128], index: 6, kind: input, shape index: {}]
  %s7 = inlined_call_operand.hbm [shape: bf16[128,128], index: 7, kind: input, shape index: {}]
  %s8 = inlined_call_operand.vmem [shape: f32[1,128], index: 8, kind: input, shape index: {}]
  %s9 = inlined_call_operand.vmem [shape: f32[8,128], index: 9, kind: output, shape index: {}]
  %s10 = sld [smem:[#allocation0]]
  $region62: #{dqn_forward.1} parent=0
    _
  %s12 = ssub.s32 1, %s10
  %s13 = scalar_select 0, %s12, %s10
  $region1: #{dqn_forward.1} parent=0
    #allocation2 [shape = 'u8[4096]{0}', space=vmem, size = 0x1000, scoped, tag = 'input window, operand 0, single buffered']
    #allocation3 [shape = 's32[1]{0}', space=sflag, size = 0x4, scoped, tag = 'scoped memory for dqn_forward.1']
    #allocation4 [shape = 'u8[32768]{0}', space=vmem, size = 0x8000, scoped, tag = 'input window, operand 3, single buffered']
    #allocation5 [shape = 's32[1]{0}', space=sflag, size = 0x4, scoped, tag = 'scoped memory for dqn_forward.1']
    #allocation6 [shape = 'u8[32768]{0}', space=vmem, size = 0x8000, scoped, tag = 'input window, operand 5, single buffered']
    #allocation7 [shape = 'u8[32768]{0}', space=vmem, size = 0x8000, scoped, tag = 'input window, operand 7, single buffered']
    #allocation8 [shape = 's32[1]{0}', space=sflag, size = 0x4, scoped, tag = 'scoped memory for dqn_forward.1']
    %14 = vsyncpa [#allocation3], 0
    %15 = vsyncpa [#allocation5], 0
    %16 = vsyncpa [#allocation8], 0
    // Predicated region
    $region2: #{dqn_forward.1} parent=1 // pred_check
      _
    $region3: #{dqn_forward.1} parent=1 // pred_check_branch
      %18 = sbr.rel (0) target = $region5
    $region4: #{dqn_forward.1} parent=1 // pred_region
      %s20 = ssub.s32 128, 128
      %21 = vsyncadd [#allocation3], %s20
      %s23 = sshll.u32 [#allocation2], 4
      %s24 = int_to_ptr.vmem [resolvable:$true] %s23
      %26 = dma.hbm_to_vmem [thread:$0]  %s0, 128, %s24, [#allocation3]
    $region5: #{dqn_forward.1} parent=1 // pred_fallthru
      _
    // Predicated region
    $region6: #{dqn_forward.1} parent=1 // pred_check
      _
    $region7: #{dqn_forward.1} parent=1 // pred_check_branch
      %28 = sbr.rel (0) target = $region9
    $region8: #{dqn_forward.1} parent=1 // pred_region
      _
    $region9: #{dqn_forward.1} parent=1 // pred_fallthru
      _
    // Predicated region
    $region10: #{dqn_forward.1} parent=1 // pred_check
      _
    $region11: #{dqn_forward.1} parent=1 // pred_check_branch
      %30 = sbr.rel (0) target = $region13
    $region12: #{dqn_forward.1} parent=1 // pred_region
      _
    $region13: #{dqn_forward.1} parent=1 // pred_fallthru
      _
    // Predicated region
    $region14: #{dqn_forward.1} parent=1 // pred_check
      _
    $region15: #{dqn_forward.1} parent=1 // pred_check_branch
      %32 = sbr.rel (0) target = $region17
    $region16: #{dqn_forward.1} parent=1 // pred_region
      %s34 = ssub.s32 1024, 1024
      %35 = vsyncadd [#allocation5], %s34
      %s36 = sshll.u32 [#allocation4], 4
      %s37 = int_to_ptr.vmem [resolvable:$true] %s36
      %42 = dma.hbm_to_vmem [thread:$0]  %s3, 1024, %s37, [#allocation5], 64, 64, 4
    $region17: #{dqn_forward.1} parent=1 // pred_fallthru
      _
    // Predicated region
    $region18: #{dqn_forward.1} parent=1 // pred_check
      _
    $region19: #{dqn_forward.1} parent=1 // pred_check_branch
      %44 = sbr.rel (0) target = $region21
    $region20: #{dqn_forward.1} parent=1 // pred_region
      _
    $region21: #{dqn_forward.1} parent=1 // pred_fallthru
      _
    // Predicated region
    $region22: #{dqn_forward.1} parent=1 // pred_check
      _
    $region23: #{dqn_forward.1} parent=1 // pred_check_branch
      %46 = sbr.rel (0) target = $region25
    $region24: #{dqn_forward.1} parent=1 // pred_region
      %s48 = ssub.s32 1024, 1024
      %49 = vsyncadd [#allocation5], %s48
      %s50 = sshll.u32 [#allocation6], 4
      %s51 = int_to_ptr.vmem [resolvable:$true] %s50
      %56 = dma.hbm_to_vmem [thread:$0]  %s5, 1024, %s51, [#allocation5], 64, 64, 4
    $region25: #{dqn_forward.1} parent=1 // pred_fallthru
      _
    // Predicated region
    $region26: #{dqn_forward.1} parent=1 // pred_check
      _
    $region27: #{dqn_forward.1} parent=1 // pred_check_branch
      %58 = sbr.rel (0) target = $region29
    $region28: #{dqn_forward.1} parent=1 // pred_region
      _
    $region29: #{dqn_forward.1} parent=1 // pred_fallthru
      _
    // Predicated region
    $region30: #{dqn_forward.1} parent=1 // pred_check
      _
    $region31: #{dqn_forward.1} parent=1 // pred_check_branch
      %60 = sbr.rel (0) target = $region33
    $region32: #{dqn_forward.1} parent=1 // pred_region
      %s62 = ssub.s32 1024, 1024
      %63 = vsyncadd [#allocation8], %s62
      %s64 = sshll.u32 [#allocation7], 4
      %s65 = int_to_ptr.vmem [resolvable:$true] %s64
      %70 = dma.hbm_to_vmem [thread:$0]  %s7, 1024, %s65, [#allocation8], 64, 64, 4
    $region33: #{dqn_forward.1} parent=1 // pred_fallthru
      _
    // Predicated region
    $region34: #{dqn_forward.1} parent=1 // pred_check
      _
    $region35: #{dqn_forward.1} parent=1 // pred_check_branch
      %72 = sbr.rel (0) target = $region37
    $region36: #{dqn_forward.1} parent=1 // pred_region
      _
    $region37: #{dqn_forward.1} parent=1 // pred_fallthru
      _
    // Predicated region
    $region38: #{dqn_forward.1} parent=1 // pred_check
      _
    $region39: #{dqn_forward.1} parent=1 // pred_check_branch
      %74 = sbr.rel (0) target = $region41
    $region40: #{dqn_forward.1} parent=1 // pred_region
      %75 = dma.done [#allocation3], 128
    $region41: #{dqn_forward.1} parent=1 // pred_fallthru
      _
    // Predicated region
    $region42: #{dqn_forward.1} parent=1 // pred_check
      _
    $region43: #{dqn_forward.1} parent=1 // pred_check_branch
      %77 = sbr.rel (0) target = $region45
    $region44: #{dqn_forward.1} parent=1 // pred_region
      %78 = dma.done [#allocation5], 1024
    $region45: #{dqn_forward.1} parent=1 // pred_fallthru
      _
    // Predicated region
    $region46: #{dqn_forward.1} parent=1 // pred_check
      _
    $region47: #{dqn_forward.1} parent=1 // pred_check_branch
      %80 = sbr.rel (0) target = $region49
    $region48: #{dqn_forward.1} parent=1 // pred_region
      %81 = dma.done [#allocation5], 1024
    $region49: #{dqn_forward.1} parent=1 // pred_fallthru
      _
    // Predicated region
    $region50: #{dqn_forward.1} parent=1 // pred_check
      _
    $region51: #{dqn_forward.1} parent=1 // pred_check_branch
      %83 = sbr.rel (0) target = $region53
    $region52: #{dqn_forward.1} parent=1 // pred_region
      %84 = dma.done [#allocation8], 1024
    $region53: #{dqn_forward.1} parent=1 // pred_fallthru
      _
    %v86 = vld [vmem:[#allocation2] sm:$0xff]
    %v87 = vpack.c.bf16 %v86, %v86
    %v88 = vld [vmem:[%s1] sm:$0xf]
    %v89 = vld [vmem:[%s1 + $0x4] sm:$0xf]
    %v90 = vld [vmem:[%s2] sm:$0x1]
    %v92 = vlaneseq
    %v93 = vshrl.u32 %v92, 7
    %v94 = vsub.s32 0, %v93
    %v95 = vrot.slane %v90, %v94
    %v99 = vunpack.c.l.b16 %v88
    %v100 = vunpack.c.l.b16 %v89
    %v101 = vpack.c.b16 %v100, %v99
    %vm103 = vcmask 130048
    %v105 = vsel %vm103, %v87, 0
    %107 = vmatprep.subr.bf16.mxu0 0
    %108 = vmatpush1.bf16.msra.mxu0 %v101
    %109 = vmatprep.subr.bf16.mxu0 0
    %110 = vmatpush1.bf16.msra.mxu0 0
    %111 = vmatprep.subr.bf16.mxu0 0
    %112 = vmatpush1.bf16.msra.mxu0 0
    %113 = vmatprep.subr.bf16.mxu0 0
    %114 = vmatpush1.bf16.msra.mxu0 0
    %115 = vmatprep.subr.bf16.mxu0 0
    %116 = vmatpush1.bf16.msra.mxu0 0
    %117 = vmatprep.subr.bf16.mxu0 0
    %118 = vmatpush1.bf16.msra.mxu0 0
    %119 = vmatprep.subr.bf16.mxu0 0
    %120 = vmatpush1.bf16.msra.mxu0 0
    %121 = vmatprep.subr.bf16.mxu0 0
    %122 = vmatpush1.bf16.msra.mxu0 0
    %123 = vmatprep.subr.bf16.mxu0 0
    %124 = vmatpush1.bf16.msra.mxu0 0
    %125 = vmatprep.subr.bf16.mxu0 0
    %126 = vmatpush1.bf16.msra.mxu0 0
    %127 = vmatprep.subr.bf16.mxu0 0
    %128 = vmatpush1.bf16.msra.mxu0 0
    %129 = vmatprep.subr.bf16.mxu0 0
    %130 = vmatpush1.bf16.msra.mxu0 0
    %131 = vmatprep.subr.bf16.mxu0 0
    %132 = vmatpush1.bf16.msra.mxu0 0
    %133 = vmatprep.subr.bf16.mxu0 0
    %134 = vmatpush1.bf16.msra.mxu0 0
    %135 = vmatprep.subr.bf16.mxu0 0
    %136 = vmatpush1.bf16.msra.mxu0 0
    %137 = vmatprep.subr.bf16.mxu0 0
    %138 = vmatpush1.bf16.msra.mxu0 0
    %139 = vmatprep.mubr.bf16.mxu0 0
    %140 = vmatmul.mubr.bf16.gmra.mrb[0].mxu0 %v105
    %v141 = vpop.f32.mrb[0].mxu0
    %v142 = vadd.f32 %v95, %v141
    %v143 = vpop.f32.mrb[0].mxu0
    %v144 = vpop.f32.mrb[0].mxu0
    %v145 = vpop.f32.mrb[0].mxu0
    %146 = vdwg.mxu0
    %v147 = vmax.f32 %v142, 0.0
    %v148 = vpack.c.bf16 %v147, %v147
    %v149 = vld [vmem:[#allocation4] sm:$0xf]
    %v150 = vld [vmem:[#allocation4 + $0x4] sm:$0xf]
    %v151 = vld [vmem:[#allocation4 + $0x8] sm:$0xf]
    %v152 = vld [vmem:[#allocation4 + $0xc] sm:$0xf]
    %v153 = vld [vmem:[#allocation4 + $0x10] sm:$0xf]
    %v154 = vld [vmem:[#allocation4 + $0x14] sm:$0xf]
    %v155 = vld [vmem:[#allocation4 + $0x18] sm:$0xf]
    %v156 = vld [vmem:[#allocation4 + $0x1c] sm:$0xf]
    %v157 = vld [vmem:[#allocation4 + $0x20] sm:$0xf]
    %v158 = vld [vmem:[#allocation4 + $0x24] sm:$0xf]
    %v159 = vld [vmem:[#allocation4 + $0x28] sm:$0xf]
    %v160 = vld [vmem:[#allocation4 + $0x2c] sm:$0xf]
    %v161 = vld [vmem:[#allocation4 + $0x30] sm:$0xf]
    %v162 = vld [vmem:[#allocation4 + $0x34] sm:$0xf]
    %v163 = vld [vmem:[#allocation4 + $0x38] sm:$0xf]
    %v164 = vld [vmem:[#allocation4 + $0x3c] sm:$0xf]
    %v165 = vld [vmem:[%s4] sm:$0x1]
    %v167 = vlaneseq
    %v168 = vshrl.u32 %v167, 7
    %v169 = vsub.s32 0, %v168
    %v170 = vrot.slane %v165, %v169
    %v188 = vunpack.c.l.b16 %v149
    %v189 = vunpack.c.l.b16 %v150
    %v190 = vunpack.c.l.b16 %v151
    %v191 = vunpack.c.l.b16 %v152
    %v192 = vunpack.c.l.b16 %v153
    %v193 = vunpack.c.l.b16 %v154
    %v194 = vunpack.c.l.b16 %v155
    %v195 = vunpack.c.l.b16 %v156
    %v196 = vunpack.c.l.b16 %v157
    %v197 = vunpack.c.l.b16 %v158
    %v198 = vunpack.c.l.b16 %v159
    %v199 = vunpack.c.l.b16 %v160
    %v200 = vunpack.c.l.b16 %v161
    %v201 = vunpack.c.l.b16 %v162
    %v202 = vunpack.c.l.b16 %v163
    %v203 = vunpack.c.l.b16 %v164
    %v204 = vpack.c.b16 %v189, %v188
    %v205 = vpack.c.b16 %v191, %v190
    %v206 = vpack.c.b16 %v193, %v192
    %v207 = vpack.c.b16 %v195, %v194
    %v208 = vpack.c.b16 %v197, %v196
    %v209 = vpack.c.b16 %v199, %v198
    %v210 = vpack.c.b16 %v201, %v200
    %v211 = vpack.c.b16 %v203, %v202
    %220 = vmatprep.subr.bf16.mxu0 0
    %221 = vmatpush1.bf16.msra.mxu0 %v204
    %222 = vmatprep.subr.bf16.mxu0 0
    %223 = vmatpush1.bf16.msra.mxu0 %v205
    %224 = vmatprep.subr.bf16.mxu0 0
    %225 = vmatpush1.bf16.msra.mxu0 %v206
    %226 = vmatprep.subr.bf16.mxu0 0
    %227 = vmatpush1.bf16.msra.mxu0 %v207
    %228 = vmatprep.subr.bf16.mxu0 0
    %229 = vmatpush1.bf16.msra.mxu0 %v208
    %230 = vmatprep.subr.bf16.mxu0 0
    %231 = vmatpush1.bf16.msra.mxu0 %v209
    %232 = vmatprep.subr.bf16.mxu0 0
    %233 = vmatpush1.bf16.msra.mxu0 %v210
    %234 = vmatprep.subr.bf16.mxu0 0
    %235 = vmatpush1.bf16.msra.mxu0 %v211
    %236 = vmatprep.subr.bf16.mxu0 0
    %237 = vmatpush1.bf16.msra.mxu0 0
    %238 = vmatprep.subr.bf16.mxu0 0
    %239 = vmatpush1.bf16.msra.mxu0 0
    %240 = vmatprep.subr.bf16.mxu0 0
    %241 = vmatpush1.bf16.msra.mxu0 0
    %242 = vmatprep.subr.bf16.mxu0 0
    %243 = vmatpush1.bf16.msra.mxu0 0
    %244 = vmatprep.subr.bf16.mxu0 0
    %245 = vmatpush1.bf16.msra.mxu0 0
    %246 = vmatprep.subr.bf16.mxu0 0
    %247 = vmatpush1.bf16.msra.mxu0 0
    %248 = vmatprep.subr.bf16.mxu0 0
    %249 = vmatpush1.bf16.msra.mxu0 0
    %250 = vmatprep.subr.bf16.mxu0 0
    %251 = vmatpush1.bf16.msra.mxu0 0
    %252 = vmatprep.mubr.bf16.mxu0 0
    %253 = vmatmul.mubr.bf16.gmra.mrb[0].mxu0 %v148
    %v254 = vpop.f32.mrb[0].mxu0
    %v255 = vadd.f32 %v170, %v254
    %v256 = vpop.f32.mrb[0].mxu0
    %v257 = vpop.f32.mrb[0].mxu0
    %v258 = vpop.f32.mrb[0].mxu0
    %259 = vdwg.mxu0
    %v260 = vmax.f32 %v255, 0.0
    %v261 = vpack.c.bf16 %v260, %v260
    %v262 = vld [vmem:[#allocation6] sm:$0xf]
    %v263 = vld [vmem:[#allocation6 + $0x4] sm:$0xf]
    %v264 = vld [vmem:[#allocation6 + $0x8] sm:$0xf]
    %v265 = vld [vmem:[#allocation6 + $0xc] sm:$0xf]
    %v266 = vld [vmem:[#allocation6 + $0x10] sm:$0xf]
    %v267 = vld [vmem:[#allocation6 + $0x14] sm:$0xf]
    %v268 = vld [vmem:[#allocation6 + $0x18] sm:$0xf]
    %v269 = vld [vmem:[#allocation6 + $0x1c] sm:$0xf]
    %v270 = vld [vmem:[#allocation6 + $0x20] sm:$0xf]
    %v271 = vld [vmem:[#allocation6 + $0x24] sm:$0xf]
    %v272 = vld [vmem:[#allocation6 + $0x28] sm:$0xf]
    %v273 = vld [vmem:[#allocation6 + $0x2c] sm:$0xf]
    %v274 = vld [vmem:[#allocation6 + $0x30] sm:$0xf]
    %v275 = vld [vmem:[#allocation6 + $0x34] sm:$0xf]
    %v276 = vld [vmem:[#allocation6 + $0x38] sm:$0xf]
    %v277 = vld [vmem:[#allocation6 + $0x3c] sm:$0xf]
    %v278 = vld [vmem:[%s6] sm:$0x1]
    %v280 = vlaneseq
    %v281 = vshrl.u32 %v280, 7
    %v282 = vsub.s32 0, %v281
    %v283 = vrot.slane %v278, %v282
    %v301 = vunpack.c.l.b16 %v262
    %v302 = vunpack.c.l.b16 %v263
    %v303 = vunpack.c.l.b16 %v264
    %v304 = vunpack.c.l.b16 %v265
    %v305 = vunpack.c.l.b16 %v266
    %v306 = vunpack.c.l.b16 %v267
    %v307 = vunpack.c.l.b16 %v268
    %v308 = vunpack.c.l.b16 %v269
    %v309 = vunpack.c.l.b16 %v270
    %v310 = vunpack.c.l.b16 %v271
    %v311 = vunpack.c.l.b16 %v272
    %v312 = vunpack.c.l.b16 %v273
    %v313 = vunpack.c.l.b16 %v274
    %v314 = vunpack.c.l.b16 %v275
    %v315 = vunpack.c.l.b16 %v276
    %v316 = vunpack.c.l.b16 %v277
    %v317 = vpack.c.b16 %v302, %v301
    %v318 = vpack.c.b16 %v304, %v303
    %v319 = vpack.c.b16 %v306, %v305
    %v320 = vpack.c.b16 %v308, %v307
    %v321 = vpack.c.b16 %v310, %v309
    %v322 = vpack.c.b16 %v312, %v311
    %v323 = vpack.c.b16 %v314, %v313
    %v324 = vpack.c.b16 %v316, %v315
    %333 = vmatprep.subr.bf16.mxu0 0
    %334 = vmatpush1.bf16.msra.mxu0 %v317
    %335 = vmatprep.subr.bf16.mxu0 0
    %336 = vmatpush1.bf16.msra.mxu0 %v318
    %337 = vmatprep.subr.bf16.mxu0 0
    %338 = vmatpush1.bf16.msra.mxu0 %v319
    %339 = vmatprep.subr.bf16.mxu0 0
    %340 = vmatpush1.bf16.msra.mxu0 %v320
    %341 = vmatprep.subr.bf16.mxu0 0
    %342 = vmatpush1.bf16.msra.mxu0 %v321
    %343 = vmatprep.subr.bf16.mxu0 0
    %344 = vmatpush1.bf16.msra.mxu0 %v322
    %345 = vmatprep.subr.bf16.mxu0 0
    %346 = vmatpush1.bf16.msra.mxu0 %v323
    %347 = vmatprep.subr.bf16.mxu0 0
    %348 = vmatpush1.bf16.msra.mxu0 %v324
    %349 = vmatprep.subr.bf16.mxu0 0
    %350 = vmatpush1.bf16.msra.mxu0 0
    %351 = vmatprep.subr.bf16.mxu0 0
    %352 = vmatpush1.bf16.msra.mxu0 0
    %353 = vmatprep.subr.bf16.mxu0 0
    %354 = vmatpush1.bf16.msra.mxu0 0
    %355 = vmatprep.subr.bf16.mxu0 0
    %356 = vmatpush1.bf16.msra.mxu0 0
    %357 = vmatprep.subr.bf16.mxu0 0
    %358 = vmatpush1.bf16.msra.mxu0 0
    %359 = vmatprep.subr.bf16.mxu0 0
    %360 = vmatpush1.bf16.msra.mxu0 0
    %361 = vmatprep.subr.bf16.mxu0 0
    %362 = vmatpush1.bf16.msra.mxu0 0
    %363 = vmatprep.subr.bf16.mxu0 0
    %364 = vmatpush1.bf16.msra.mxu0 0
    %365 = vmatprep.mubr.bf16.mxu0 0
    %366 = vmatmul.mubr.bf16.gmra.mrb[0].mxu0 %v261
    %v367 = vpop.f32.mrb[0].mxu0
    %v368 = vadd.f32 %v283, %v367
    %v369 = vpop.f32.mrb[0].mxu0
    %v370 = vpop.f32.mrb[0].mxu0
    %v371 = vpop.f32.mrb[0].mxu0
    %372 = vdwg.mxu0
    %v373 = vmax.f32 %v368, 0.0
    %v374 = vpack.c.bf16 %v373, %v373
    %v375 = vld [vmem:[#allocation7] sm:$0xf]
    %v376 = vld [vmem:[#allocation7 + $0x4] sm:$0xf]
    %v377 = vld [vmem:[#allocation7 + $0x8] sm:$0xf]
    %v378 = vld [vmem:[#allocation7 + $0xc] sm:$0xf]
    %v379 = vld [vmem:[#allocation7 + $0x10] sm:$0xf]
    %v380 = vld [vmem:[#allocation7 + $0x14] sm:$0xf]
    %v381 = vld [vmem:[#allocation7 + $0x18] sm:$0xf]
    %v382 = vld [vmem:[#allocation7 + $0x1c] sm:$0xf]
    %v383 = vld [vmem:[#allocation7 + $0x20] sm:$0xf]
    %v384 = vld [vmem:[#allocation7 + $0x24] sm:$0xf]
    %v385 = vld [vmem:[#allocation7 + $0x28] sm:$0xf]
    %v386 = vld [vmem:[#allocation7 + $0x2c] sm:$0xf]
    %v387 = vld [vmem:[#allocation7 + $0x30] sm:$0xf]
    %v388 = vld [vmem:[#allocation7 + $0x34] sm:$0xf]
    %v389 = vld [vmem:[#allocation7 + $0x38] sm:$0xf]
    %v390 = vld [vmem:[#allocation7 + $0x3c] sm:$0xf]
    %v391 = vld [vmem:[%s8] sm:$0x1]
    %v393 = vlaneseq
    %v394 = vshrl.u32 %v393, 7
    %v395 = vsub.s32 0, %v394
    %v396 = vrot.slane %v391, %v395
    %v414 = vunpack.c.l.b16 %v375
    %v415 = vunpack.c.l.b16 %v376
    %v416 = vunpack.c.l.b16 %v377
    %v417 = vunpack.c.l.b16 %v378
    %v418 = vunpack.c.l.b16 %v379
    %v419 = vunpack.c.l.b16 %v380
    %v420 = vunpack.c.l.b16 %v381
    %v421 = vunpack.c.l.b16 %v382
    %v422 = vunpack.c.l.b16 %v383
    %v423 = vunpack.c.l.b16 %v384
    %v424 = vunpack.c.l.b16 %v385
    %v425 = vunpack.c.l.b16 %v386
    %v426 = vunpack.c.l.b16 %v387
    %v427 = vunpack.c.l.b16 %v388
    %v428 = vunpack.c.l.b16 %v389
    %v429 = vunpack.c.l.b16 %v390
    %v430 = vpack.c.b16 %v415, %v414
    %v431 = vpack.c.b16 %v417, %v416
    %v432 = vpack.c.b16 %v419, %v418
    %v433 = vpack.c.b16 %v421, %v420
    %v434 = vpack.c.b16 %v423, %v422
    %v435 = vpack.c.b16 %v425, %v424
    %v436 = vpack.c.b16 %v427, %v426
    %v437 = vpack.c.b16 %v429, %v428
    %446 = vmatprep.subr.bf16.mxu0 0
    %447 = vmatpush1.bf16.msra.mxu0 %v430
    %448 = vmatprep.subr.bf16.mxu0 0
    %449 = vmatpush1.bf16.msra.mxu0 %v431
    %450 = vmatprep.subr.bf16.mxu0 0
    %451 = vmatpush1.bf16.msra.mxu0 %v432
    %452 = vmatprep.subr.bf16.mxu0 0
    %453 = vmatpush1.bf16.msra.mxu0 %v433
    %454 = vmatprep.subr.bf16.mxu0 0
    %455 = vmatpush1.bf16.msra.mxu0 %v434
    %456 = vmatprep.subr.bf16.mxu0 0
    %457 = vmatpush1.bf16.msra.mxu0 %v435
    %458 = vmatprep.subr.bf16.mxu0 0
    %459 = vmatpush1.bf16.msra.mxu0 %v436
    %460 = vmatprep.subr.bf16.mxu0 0
    %461 = vmatpush1.bf16.msra.mxu0 %v437
    %462 = vmatprep.subr.bf16.mxu0 0
    %463 = vmatpush1.bf16.msra.mxu0 0
    %464 = vmatprep.subr.bf16.mxu0 0
    %465 = vmatpush1.bf16.msra.mxu0 0
    %466 = vmatprep.subr.bf16.mxu0 0
    %467 = vmatpush1.bf16.msra.mxu0 0
    %468 = vmatprep.subr.bf16.mxu0 0
    %469 = vmatpush1.bf16.msra.mxu0 0
    %470 = vmatprep.subr.bf16.mxu0 0
    %471 = vmatpush1.bf16.msra.mxu0 0
    %472 = vmatprep.subr.bf16.mxu0 0
    %473 = vmatpush1.bf16.msra.mxu0 0
    %474 = vmatprep.subr.bf16.mxu0 0
    %475 = vmatpush1.bf16.msra.mxu0 0
    %476 = vmatprep.subr.bf16.mxu0 0
    %477 = vmatpush1.bf16.msra.mxu0 0
    %478 = vmatprep.mubr.bf16.mxu0 0
    %479 = vmatmul.mubr.bf16.gmra.mrb[0].mxu0 %v374
    %v480 = vpop.f32.mrb[0].mxu0
    %v481 = vadd.f32 %v396, %v480
    %v482 = vpop.f32.mrb[0].mxu0
    %v483 = vpop.f32.mrb[0].mxu0
    %v484 = vpop.f32.mrb[0].mxu0
    %485 = vdwg.mxu0
    %486 = vst [vmem:[%s9] sm:$0xff] %v481
    // Predicated region
    $region54: #{dqn_forward.1} parent=1 // pred_check
      _
    $region55: #{dqn_forward.1} parent=1 // pred_check_branch
      %488 = sbr.rel (0) target = $region57
    $region56: #{dqn_forward.1} parent=1 // pred_region
      _
    $region57: #{dqn_forward.1} parent=1 // pred_fallthru
      _
    // Predicated region
    $region58: #{dqn_forward.1} parent=1 // pred_check
      _
    $region59: #{dqn_forward.1} parent=1 // pred_check_branch
      %490 = sbr.rel (0) target = $region61
    $region60: #{dqn_forward.1} parent=1 // pred_region
      _
    $region61: #{dqn_forward.1} parent=1 // pred_fallthru
      _
    %491 = vsyncpa [#allocation3], 1
    %492 = vsyncpa [#allocation5], 1
    %493 = vsyncpa [#allocation8], 1

</llo_original>
